<compile_context>
chip_gen: v6e
topology: v6e:2x2x1
jax: 0.10.0
libtpu: 0.0.40
codegen_flags: <defaults>
</compile_context>

<pallas_src>
import numpy as np

import jax
import jax.numpy as jnp
from jax.experimental import pallas as pl
from jax.experimental.pallas import tpu as pltpu


# ----------------------------------------------------------------------------
# Small helpers.
# ----------------------------------------------------------------------------
def _round_up(x, m):
    return ((x + m - 1) // m) * m


def _pick_tile(d):
    # Largest tile in {128, 256, 512} that does not increase the padded size
    # (ties go to the bigger tile).  Bigger tiles keep the 256-wide MXU on
    # v6e/v7x fed and hit ~85% of HBM roofline; the "no extra padding" rule
    # bounds wasted DMA on awkward dims and keeps v5e (128-wide MXU) happy.
    best, best_p = 128, _round_up(d, 128)
    for t in (256, 512):
        p = _round_up(d, t)
        if p <= best_p:
            best, best_p = t, p
    return best


# ----------------------------------------------------------------------------
# Resize weight construction (host-side numpy: shapes are static once the
# sampled scale has been concretized, and the matrices are tiny).
# ----------------------------------------------------------------------------
def _bilinear_weights_np(in_size, out_size, antialias):
    """Dense (out, in) separable resize weights, torchvision convention:
    half-pixel centers, triangle (antialias) filter, row-normalised."""
    scale = in_size / out_size
    support = max(scale, 1.0) if antialias else 1.0
    i = np.arange(out_size, dtype=np.float64)[:, None]
    j = np.arange(in_size, dtype=np.float64)[None, :]
    center = (i + 0.5) * scale
    w = np.maximum(0.0, 1.0 - np.abs((j + 0.5 - center) / support))
    # Row-normalisation also reproduces the border clamp of align_corners=False
    # bilinear at the image edges.
    w = w / w.sum(axis=1, keepdims=True)
    return w.astype(np.float32)


def _nearest_onehot_np(in_size, out_size):
    """(out, in) one-hot selection matrix: torch legacy 'nearest'
    (idx = floor(i * in/out))."""
    idx = np.minimum((np.arange(out_size) * (in_size / out_size)).astype(np.int64),
                     in_size - 1)
    w = np.zeros((out_size, in_size), np.float32)
    w[np.arange(out_size), idx] = 1.0
    return w


def _band_offsets_np(w_pad, row_tile, k_tile):
    """Per output-row-block K-block offsets for a banded (out_p, in_p) weight
    matrix, plus the (uniform) number of K blocks needed.  Everything outside
    [koff*k_tile, (koff+kb)*k_tile) is guaranteed zero for the rows of that
    block, so the contraction may skip it."""
    out_p, in_p = w_pad.shape
    nz = w_pad != 0.0
    has = nz.any(axis=1)
    first = np.where(has, nz.argmax(axis=1), in_p - 1)
    last = np.where(has, in_p - 1 - nz[:, ::-1].argmax(axis=1), 0)
    nb = out_p // row_tile
    firstb = first.reshape(nb, row_tile).min(axis=1)
    lastb = last.reshape(nb, row_tile).max(axis=1)
    lastb = np.maximum(lastb, firstb)          # all-padding blocks
    koff = firstb // k_tile
    need = -(-(lastb + 1 - koff * k_tile) // k_tile)
    k_total = in_p // k_tile
    kb = int(min(max(need.max(), 1), k_total))
    koff = np.clip(koff, 0, k_total - kb)
    return koff.astype(np.int32), kb


# ----------------------------------------------------------------------------
# Pallas kernels: banded, batched resize matmuls with an f32 VMEM accumulator.
# Grid is (channel, M-block, N-block, K-block); K is last ("arbitrary").
# ----------------------------------------------------------------------------
def _width_pass_kernel(koff_ref, x_ref, w_ref, o_ref, acc_ref):
    # x_ref: (1, tH, tK) image rows;  w_ref: (tK, tNW) width weights (W->new_w).
    del koff_ref  # consumed by the index_maps only
    @pl.when(pl.program_id(3) == 0)
    def _():
        acc_ref[...] = jnp.zeros_like(acc_ref)

    acc_ref[...] += jnp.dot(x_ref[0], w_ref[...],
                            preferred_element_type=jnp.float32)

    @pl.when(pl.program_id(3) == pl.num_programs(3) - 1)
    def _():
        o_ref[0] = acc_ref[...].astype(o_ref.dtype)


def _height_pass_kernel(koff_ref, w_ref, x_ref, o_ref, acc_ref):
    # w_ref: (tNH, tK) height weights (H->new_h);  x_ref: (1, tK, tNW) pass-1 out.
    del koff_ref
    @pl.when(pl.program_id(3) == 0)
    def _():
        acc_ref[...] = jnp.zeros_like(acc_ref)

    acc_ref[...] += jnp.dot(w_ref[...], x_ref[0],
                            preferred_element_type=jnp.float32)

    @pl.when(pl.program_id(3) == pl.num_programs(3) - 1)
    def _():
        o_ref[0] = acc_ref[...].astype(o_ref.dtype)


# ----------------------------------------------------------------------------
# Separable resize front-end (shared by bilinear image resize and one-hot
# nearest resize of images / masks).
# ----------------------------------------------------------------------------
def _separable_resize(x, wh_np, ww_np, compute_dtype):
    """x: (B, H, W).  wh_np: (new_h, H), ww_np: (new_w, W) host weight matrices.
    Returns (B, new_h, new_w) in `compute_dtype`."""
    B, H, W = x.shape
    new_h, new_w = int(wh_np.shape[0]), int(ww_np.shape[0])

    tK = 128                              # contraction tile (band is short)
    tH = _pick_tile(H)                    # M tile of the width pass
    tNH = _pick_tile(new_h)               # M tile of the height pass
    tNW = _pick_tile(new_w)               # N tile of both passes
    Hp = _round_up(H, tH)                 # tH is a 128-multiple -> also OK as K
    Wp = _round_up(W, tK)
    NHp = _round_up(new_h, tNH)
    NWp = _round_up(new_w, tNW)

    # Single up-front pad of the source; padding of every other operand lives
    # in the host-built weight matrices, so nothing is sliced/re-padded between
    # the two passes.  Only the final output is sliced.
    xp = jnp.pad(x.astype(compute_dtype), ((0, 0), (0, Hp - H), (0, Wp - W)))

    ww_pad = np.zeros((NWp, Wp), np.float32)
    ww_pad[:new_w, :W] = ww_np
    wh_pad = np.zeros((NHp, Hp), np.float32)
    wh_pad[:new_h, :H] = wh_np
    koff_w, kb_w = _band_offsets_np(ww_pad, tNW, tK)    # indexed by N-block j
    koff_h, kb_h = _band_offsets_np(wh_pad, tNH, tK)    # indexed by M-block i

    wwT = jnp.asarray(ww_pad.T, dtype=compute_dtype)    # (Wp, NWp)
    wh = jnp.asarray(wh_pad, dtype=compute_dtype)       # (NHp, Hp)

    # ---- pass 1: width (no reshape / transpose of the CHW source) ----
    y1 = pl.pallas_call(
        _width_pass_kernel,
        out_shape=jax.ShapeDtypeStruct((B, Hp, NWp), compute_dtype),
        grid_spec=pltpu.PrefetchScalarGridSpec(
            num_scalar_prefetch=1,
            grid=(B, Hp // tH, NWp // tNW, kb_w),
            in_specs=[
                pl.BlockSpec((1, tH, tK),
                             lambda c, i, j, k, koff: (c, i, koff[j] + k)),
                pl.BlockSpec((tK, tNW),
                             lambda c, i, j, k, koff: (koff[j] + k, j)),
            ],
            out_specs=pl.BlockSpec((1, tH, tNW),
                                   lambda c, i, j, k, koff: (c, i, j)),
            scratch_shapes=[pltpu.VMEM((tH, tNW), jnp.float32)],
        ),
        compiler_params=pltpu.CompilerParams(
            dimension_semantics=("parallel", "parallel", "parallel", "arbitrary")),
    )(jnp.asarray(koff_w), xp, wwT)

    # ---- pass 2: height (batched over channels, writes CHW directly) ----
    out_p = pl.pallas_call(
        _height_pass_kernel,
        out_shape=jax.ShapeDtypeStruct((B, NHp, NWp), compute_dtype),
        grid_spec=pltpu.PrefetchScalarGridSpec(
            num_scalar_prefetch=1,
            grid=(B, NHp // tNH, NWp // tNW, kb_h),
            in_specs=[
                pl.BlockSpec((tNH, tK),
                             lambda c, i, j, k, koff: (i, koff[i] + k)),
                pl.BlockSpec((1, tK, tNW),
                             lambda c, i, j, k, koff: (c, koff[i] + k, j)),
            ],
            out_specs=pl.BlockSpec((1, tNH, tNW),
                                   lambda c, i, j, k, koff: (c, i, j)),
            scratch_shapes=[pltpu.VMEM((tNH, tNW), jnp.float32)],
        ),
        compiler_params=pltpu.CompilerParams(
            dimension_semantics=("parallel", "parallel", "parallel", "arbitrary")),
    )(jnp.asarray(koff_h), wh, y1)

    return out_p[:, :new_h, :new_w]


def _resize3d(x, wh_np, ww_np):
    orig_dtype = x.dtype
    # f32 for float inputs (fidelity, avoids double rounding); bf16 for
    # bool/int masks (exact for one-hot weights and small integer values,
    # half the HBM traffic of f32).
    compute_dtype = (jnp.float32 if jnp.issubdtype(orig_dtype, jnp.floating)
                     else jnp.bfloat16)
    y = _separable_resize(x, wh_np, ww_np, compute_dtype)
    return y.astype(orig_dtype)


# ----------------------------------------------------------------------------
# ScaleJitter.forward equivalent.
# ----------------------------------------------------------------------------
def scale_jitter(key, image, target=None, *, target_size,
                 scale_range=(0.1, 2.0), interpolation="bilinear",
                 antialias=True):
    if image.ndim not in (2, 3):
        raise ValueError(f"image should be 2/3 dimensional. Got {image.ndim}.")
    if image.ndim == 2:
        image = image[None]
    _, orig_h, orig_w = image.shape

    # The module's output shape is data-dependent on the sampled scale; a
    # fixed-shape kernel cannot express that, so the sample is concretised on
    # the host here (deterministic w.r.t. `key`).
    scale = float(jax.random.uniform(
        key, (), jnp.float32, scale_range[0], scale_range[1]))
    r = min(target_size[1] / orig_h, target_size[0] / orig_w) * scale
    new_w = max(int(orig_w * r), 1)
    new_h = max(int(orig_h * r), 1)

    if interpolation == "bilinear":
        wh = _bilinear_weights_np(orig_h, new_h, antialias)
        ww = _bilinear_weights_np(orig_w, new_w, antialias)
    elif interpolation == "nearest":
        wh = _nearest_onehot_np(orig_h, new_h)
        ww = _nearest_onehot_np(orig_w, new_w)
    else:
        raise ValueError(f"unsupported interpolation: {interpolation}")
    image_out = _resize3d(image, wh, ww)

    target_out = None
    if target is not None:
        target_out = dict(target)
        boxes = target["boxes"]
        # Plain JAX: a Pallas kernel for an (N, 4) elementwise multiply is pure
        # launch overhead (lane-sparse masked stores).
        box_scale = jnp.asarray(
            [new_w / orig_w, new_h / orig_h, new_w / orig_w, new_h / orig_h],
            boxes.dtype)
        target_out["boxes"] = boxes * box_scale
        if "masks" in target:
            wh_n = _nearest_onehot_np(orig_h, new_h)
            ww_n = _nearest_onehot_np(orig_w, new_w)
            target_out["masks"] = _resize3d(target["masks"], wh_n, ww_n)
    return image_out, target_out


# ----------------------------------------------------------------------------
# Demo / self-check.
# ----------------------------------------------------------------------------
if __name__ == "__main__":
    key = jax.random.PRNGKey(0)
    k_img, k_box, k_mask, k_scale = jax.random.split(key, 4)

    C, H, W = 3, 24, 32
    image = jax.random.uniform(k_img, (C, H, W), jnp.float32)
    boxes = jax.random.uniform(k_box, (5, 4), jnp.float32) * jnp.asarray(
        [W, H, W, H], jnp.float32)
    masks = (jax.random.uniform(k_mask, (2, H, W)) > 0.5).astype(jnp.float32)
    target = {"boxes": boxes, "masks": masks}

    image_out, target_out = scale_jitter(
        k_scale, image, target,
        target_size=(48, 40), scale_range=(0.5, 1.5),
        interpolation="bilinear", antialias=True)

    jax.block_until_ready(
        (image_out, target_out["boxes"], target_out["masks"]))

    new_h, new_w = int(image_out.shape[1]), int(image_out.shape[2])

    # Expected output size (same key -> same sampled scale).
    scale = float(jax.random.uniform(k_scale, (), jnp.float32, 0.5, 1.5))
    r = min(40 / H, 48 / W) * scale
    assert (new_h, new_w) == (max(int(H * r), 1), max(int(W * r), 1))

    # ---- correctness checks against pure-JAX references (all-f32 path) ----
    wh_ref = jnp.asarray(_bilinear_weights_np(H, new_h, True))
    ww_ref = jnp.asarray(_bilinear_weights_np(W, new_w, True))
    ref_img = jnp.einsum("oh,chw,pw->cop", wh_ref, image, ww_ref)
    assert image_out.shape == (C, new_h, new_w)
    assert jnp.allclose(image_out, ref_img, atol=1e-4, rtol=1e-4), (
        float(jnp.max(jnp.abs(image_out - ref_img))))

    h_idx = np.minimum((np.arange(new_h) * (H / new_h)).astype(np.int64), H - 1)
    w_idx = np.minimum((np.arange(new_w) * (W / new_w)).astype(np.int64), W - 1)
    ref_masks = masks[:, h_idx, :][:, :, w_idx]
    assert target_out["masks"].shape == (2, new_h, new_w)
    assert bool(jnp.array_equal(target_out["masks"], ref_masks))

    ref_boxes = boxes * jnp.asarray(
        [new_w / W, new_h / H, new_w / W, new_h / H], jnp.float32)
    assert bool(jnp.allclose(target_out["boxes"], ref_boxes))

    print("KERNEL_OK")
</pallas_src>

<mosaic_0001>
module attributes {stable_mosaic.version = 11 : i64} {
  func.func @_width_pass_kernel(%arg0: i32, %arg1: i32, %arg2: i32, %arg3: i32, %arg4: memref<1xi32, #tpu.memory_space<smem>>, %arg5: memref<1x128x128xf32, #tpu.memory_space<vmem>>, %arg6: memref<128x128xf32, #tpu.memory_space<vmem>>, %arg7: memref<1x128x128xf32, #tpu.memory_space<vmem>>, %arg8: memref<128x128xf32, #tpu.memory_space<vmem>>) attributes {dimension_semantics = [#tpu.dimension_semantics<parallel>, #tpu.dimension_semantics<parallel>, #tpu.dimension_semantics<parallel>, #tpu.dimension_semantics<arbitrary>], iteration_bounds = array<i64: 3, 1, 1, 1>, scalar_prefetch = 1 : i64, scratch_operands = 1 : i64, tpu.core_type = #tpu.core_type<tc>, window_params = [{transform_indices = @transform_0, window_bounds = array<i64: 1, 128, 128>}, {transform_indices = @transform_1, window_bounds = array<i64: 128, 128>}, {transform_indices = @transform_2, window_bounds = array<i64: 1, 128, 128>}]} {
    %c0_i32 = arith.constant 0 : i32
    %0 = arith.cmpi eq, %arg3, %c0_i32 : i32
    %1 = arith.extui %0 : i1 to i32
    %c0_i32_0 = arith.constant 0 : i32
    %2 = arith.cmpi ne, %1, %c0_i32_0 : i32
    scf.if %2 {
      %cst_11 = arith.constant 0.000000e+00 : f32
      %13 = vector.broadcast %cst_11 : f32 to vector<128x128xf32>
      %c0_12 = arith.constant 0 : index
      %c0_13 = arith.constant 0 : index
      %14 = vector.load %arg8[%c0_12, %c0_13] : memref<128x128xf32, #tpu.memory_space<vmem>>, vector<128x128xf32>
      tpu.vector_store %arg8[%c0_12, %c0_13], %13 {strides = array<i32>} : memref<128x128xf32, #tpu.memory_space<vmem>>, vector<128x128xf32>,
    } else {
    }
    %c0 = arith.constant 0 : index
    %c0_1 = arith.constant 0 : index
    %3 = vector.load %arg8[%c0, %c0_1] : memref<128x128xf32, #tpu.memory_space<vmem>>, vector<128x128xf32>
    %c0_2 = arith.constant 0 : index
    %c0_3 = arith.constant 0 : index
    %c0_4 = arith.constant 0 : index
    %4 = vector.load %arg5[%c0_2, %c0_3, %c0_4] : memref<1x128x128xf32, #tpu.memory_space<vmem>>, vector<1x128x128xf32>
    %5 = vector.shape_cast %4 : vector<1x128x128xf32> to vector<128x128xf32>
    %c0_5 = arith.constant 0 : index
    %c0_6 = arith.constant 0 : index
    %6 = vector.load %arg6[%c0_5, %c0_6] : memref<128x128xf32, #tpu.memory_space<vmem>>, vector<128x128xf32>
    %cst = arith.constant dense<0.000000e+00> : vector<128x128xf32>
    %7 = tpu.matmul %5, %6, %cst {dimension_numbers = #tpu.dot_dimension_numbers<[1], [0], [0], [1], [0, 0, 1, 1], [], []>} : vector<128x128xf32>, vector<128x128xf32>, vector<128x128xf32> -> vector<128x128xf32>
    %8 = arith.addf %3, %7 : vector<128x128xf32>
    %c0_7 = arith.constant 0 : index
    %c0_8 = arith.constant 0 : index
    %9 = vector.load %arg8[%c0_7, %c0_8] : memref<128x128xf32, #tpu.memory_space<vmem>>, vector<128x128xf32>
    tpu.vector_store %arg8[%c0_7, %c0_8], %8 {strides = array<i32>} : memref<128x128xf32, #tpu.memory_space<vmem>>, vector<128x128xf32>,
    %c0_i32_9 = arith.constant 0 : i32
    %10 = arith.cmpi eq, %arg3, %c0_i32_9 : i32
    %11 = arith.extui %10 : i1 to i32
    %c0_i32_10 = arith.constant 0 : i32
    %12 = arith.cmpi ne, %11, %c0_i32_10 : i32
    scf.if %12 {
      %c0_11 = arith.constant 0 : index
      %c0_12 = arith.constant 0 : index
      %13 = vector.load %arg8[%c0_11, %c0_12] : memref<128x128xf32, #tpu.memory_space<vmem>>, vector<128x128xf32>
      %c0_13 = arith.constant 0 : index
      %c0_14 = arith.constant 0 : index
      %c0_15 = arith.constant 0 : index
      %14 = vector.load %arg7[%c0_13, %c0_14, %c0_15] : memref<1x128x128xf32, #tpu.memory_space<vmem>>, vector<1x128x128xf32>
      %15 = vector.shape_cast %14 : vector<1x128x128xf32> to vector<128x128xf32>
      %16 = vector.shape_cast %13 : vector<128x128xf32> to vector<1x128x128xf32>
      tpu.vector_store %arg7[%c0_13, %c0_14, %c0_15], %16 {strides = array<i32>} : memref<1x128x128xf32, #tpu.memory_space<vmem>>, vector<1x128x128xf32>,
    } else {
    }
    return
  }
  func.func @transform_0(%arg0: i32, %arg1: i32, %arg2: i32, %arg3: i32, %arg4: memref<1xi32, #tpu.memory_space<smem>>) -> (i32, i32, i32) {
    %0 = arith.index_cast %arg2 : i32 to index
    %1 = memref.load %arg4[%0] : memref<1xi32, #tpu.memory_space<smem>>
    %2 = arith.addi %1, %arg3 : i32
    %c0_i32 = arith.constant 0 : i32
    return %arg0, %arg1, %2 : i32, i32, i32
  }
  func.func @transform_1(%arg0: i32, %arg1: i32, %arg2: i32, %arg3: i32, %arg4: memref<1xi32, #tpu.memory_space<smem>>) -> (i32, i32) {
    %0 = arith.index_cast %arg2 : i32 to index
    %1 = memref.load %arg4[%0] : memref<1xi32, #tpu.memory_space<smem>>
    %2 = arith.addi %1, %arg3 : i32
    %c0_i32 = arith.constant 0 : i32
    return %2, %arg2 : i32, i32
  }
  func.func @transform_2(%arg0: i32, %arg1: i32, %arg2: i32, %arg3: i32, %arg4: memref<1xi32, #tpu.memory_space<smem>>) -> (i32, i32, i32) {
    %c0_i32 = arith.constant 0 : i32
    return %arg0, %arg1, %arg2 : i32, i32, i32
  }
}

</mosaic_0001>

<llo_original>
// kernel: tpu_custom_call.1
$region0: #{tpu_custom_call.1}
  #allocation0 [shape = 'u32[]', space=smem, size = 0x4, offset = 0x4, fixed_abs, tag = 'smem constant byte address 0x4 - core index']
  #allocation1 [shape = 'u32[144,128]{1,0:T(1,128)}', space=vmem, size = 0x12000, scoped, tag = 'internal scratch']
  #allocation2 [shape = 'f32[128,128]{1,0:T(8,128)}', space=vmem, size = 0x10000, scoped, tag = 'scratch operand']
  #allocation3 [shape = 's32[1]{0}', space=sflag, size = 0x4, scoped, tag = 'scoped memory for tpu_custom_call.1']
  #allocation4 [shape = 's32[1]{0:T(128)S(6)}', space=smem, size = 0x200, scoped, tag = 'prefetched SMEM operand 0']
  %s0 = inlined_call_operand.<no memory space> [shape: s32[1], index: 0, kind: input, shape index: {}]
  %s1 = inlined_call_operand.hbm [shape: f32[3,128,128], index: 1, kind: input, shape index: {}]
  %s2 = inlined_call_operand.hbm [shape: f32[128,128], index: 2, kind: input, shape index: {}]
  %s3 = inlined_call_operand.hbm [shape: f32[3,128,128], index: 3, kind: output, shape index: {}]
  %s4 = sld [smem:[#allocation0]]
  $region57: #{tpu_custom_call.1} parent=0
    _
  %s6 = ssub.s32 1, %s4
  %s7 = scalar_select 0, %s6, %s4
  %8 = sst [smem:[#allocation4]] %s0
  $region1: #{tpu_custom_call.1} parent=0
    #allocation5 [shape = 'u8[131072]{0}', space=vmem, size = 0x20000, scoped, tag = 'input window, operand 1']
    #allocation6 [shape = 's32[2]{0}', space=sflag, size = 0x8, scoped, tag = 'scoped memory for tpu_custom_call.1']
    #allocation7 [shape = 's32[2]{0}', space=sflag, size = 0x8, scoped, tag = 'scoped memory for tpu_custom_call.1']
    #allocation8 [shape = 'u8[65536]{0}', space=vmem, size = 0x10000, scoped, tag = 'input window, operand 2, single buffered']
    #allocation9 [shape = 's32[1]{0}', space=sflag, size = 0x4, scoped, tag = 'scoped memory for tpu_custom_call.1']
    #allocation10 [shape = 'u8[131072]{0}', space=vmem, size = 0x20000, scoped, tag = 'output window, operand 0']
    %9 = vsyncpa [#allocation6], 0
    %s10 = scalar_lea.sflag [#allocation6], 1
    %11 = vsyncpa %s10, 0
    %12 = vsyncpa [#allocation9], 0
    %13 = vsyncpa [#allocation7], 0
    %s14 = scalar_lea.sflag [#allocation7], 1
    %15 = vsyncpa %s14, 0
    loop: start=0, step=1, limit=5
    $region2: #{tpu_custom_call.1} parent=1 // loop_pre_header
      _
    $region3: #{tpu_custom_call.1} parent=1 // loop_header
      %s17 = sphi 0, %s21
      %p18 = scmp.ge.s32.totalorder %s17, 5
      %s24 = sphi 0, %s50
      %s25 = sphi 0, %s46
      %s26 = sphi 0, %s42
      %s27 = sphi 0, %s38
      %s28 = sphi 0, %s24
      %s29 = sphi 0, %s25
      %s30 = sphi 0, %s26
      %s31 = sphi 0, %s27
      %s32 = sphi 0, %s28
      %s33 = sphi 0, %s29
      %s34 = sphi 0, %s30
      %s35 = sphi 0, %s31
      %s61 = sphi 0, %s63
      %s64 = sphi 0, %s61
      %s65 = sphi 0, %s64
      %s81 = sphi 0, %s65
      %s93 = sphi 0, %s95
      %s96 = sphi 0, %s93
      %s97 = sphi 0, %s96
      %s113 = sphi 0, %s97
      %s123 = sphi 0, %s125
      %s126 = sphi 0, %s123
      %s127 = sphi 0, %s126
      %s143 = sphi 0, %s127
    $region4: #{tpu_custom_call.1} parent=1 // loop_header_branch
      %20 = sbr.rel (%p18) target = $region8
    $region5: #{tpu_custom_call.1} parent=1 // loop_body
      %s22 = ssub.s32 %s17, 1
      %s23 = ssub.s32 %s17, 2
      %s36 = sadd.s32 1, %s27
      %p37 = scmp.ge.s32.totalorder %s36, 1
      %s38 = scalar_select %p37, 0, %s36
      %s39 = sadd.s32 1, %s26
      %s40 = scalar_select %p37, %s39, %s26
      %p41 = scmp.ge.s32.totalorder %s40, 1
      %s42 = scalar_select %p41, 0, %s40
      %s43 = sadd.s32 1, %s25
      %s44 = scalar_select %p41, %s43, %s25
      %p45 = scmp.ge.s32.totalorder %s44, 1
      %s46 = scalar_select %p45, 0, %s44
      %s47 = sadd.s32 1, %s24
      %s48 = scalar_select %p45, %s47, %s24
      %p49 = scmp.ge.s32.totalorder %s48, 3
      %s50 = scalar_select %p49, 0, %s48
      %s51 = sld [smem:[#allocation4 + %s26]]
      %s52 = sadd.s32 %s51, %s27
      %s53 = sld [smem:[#allocation4 + %s42]]
      %s54 = sadd.s32 %s53, %s38
      %s55 = ssub.s32 %s24, %s50
      %s56 = ssub.s32 %s25, %s46
      %s57 = sor.u32 %s55, %s56
      %s58 = ssub.s32 %s52, %s54
      %s59 = sor.u32 %s57, %s58
      %p60 = scmp.eq.s32.totalorder %s59, 0
      %s62 = sadd.s32 %s61, 1
      %s63 = scalar_select %p60, %s61, %s62
      %p66 = pneg %p60
      %p67 = scmp.eq.s32.totalorder %s17, 2
      %p68 = por %p66, %p67
      %p69 = scmp.ne.s32.totalorder %s61, %s64
      %p70 = scmp.eq.s32.totalorder %s17, 0
      %p71 = por %p69, %p70
      %p72 = scmp.ne.s32.totalorder %s61, %s64
      %p73 = scmp.eq.s32.totalorder %s22, 2
      %p74 = por %p72, %p73
      %p75 = scmp.ne.s32.totalorder %s64, %s65
      %p76 = scmp.eq.s32.totalorder %s22, 0
      %p77 = por %p75, %p76
      %p78 = scmp.ne.s32.totalorder %s64, %s65
      %p79 = scmp.eq.s32.totalorder %s23, 2
      %p80 = por %p78, %p79
      %p82 = scmp.ne.s32.totalorder %s65, %s81
      %p83 = scmp.eq.s32.totalorder %s23, 0
      %p84 = por %p82, %p83
      %s85 = sld [smem:[#allocation4 + %s26]]
      %s86 = sadd.s32 %s85, %s27
      %s87 = sld [smem:[#allocation4 + %s42]]
      %s88 = sadd.s32 %s87, %s38
      %s89 = ssub.s32 %s86, %s88
      %s90 = ssub.s32 %s26, %s42
      %s91 = sor.u32 %s89, %s90
      %p92 = scmp.eq.s32.totalorder %s91, 0
      %s94 = sadd.s32 %s93, 1
      %s95 = scalar_select %p92, %s93, %s94
      %p98 = pneg %p92
      %p99 = scmp.eq.s32.totalorder %s17, 2
      %p100 = por %p98, %p99
      %p101 = scmp.ne.s32.totalorder %s93, %s96
      %p102 = scmp.eq.s32.totalorder %s17, 0
      %p103 = por %p101, %p102
      %p104 = scmp.ne.s32.totalorder %s93, %s96
      %p105 = scmp.eq.s32.totalorder %s22, 2
      %p106 = por %p104, %p105
      %p107 = scmp.ne.s32.totalorder %s96, %s97
      %p108 = scmp.eq.s32.totalorder %s22, 0
      %p109 = por %p107, %p108
      %p110 = scmp.ne.s32.totalorder %s96, %s97
      %p111 = scmp.eq.s32.totalorder %s23, 2
      %p112 = por %p110, %p111
      %p114 = scmp.ne.s32.totalorder %s97, %s113
      %p115 = scmp.eq.s32.totalorder %s23, 0
      %p116 = por %p114, %p115
      %s117 = ssub.s32 %s24, %s50
      %s118 = ssub.s32 %s25, %s46
      %s119 = sor.u32 %s117, %s118
      %s120 = ssub.s32 %s26, %s42
      %s121 = sor.u32 %s119, %s120
      %p122 = scmp.eq.s32.totalorder %s121, 0
      %s124 = sadd.s32 %s123, 1
      %s125 = scalar_select %p122, %s123, %s124
      %p128 = pneg %p122
      %p129 = scmp.eq.s32.totalorder %s17, 2
      %p130 = por %p128, %p129
      %p131 = scmp.ne.s32.totalorder %s123, %s126
      %p132 = scmp.eq.s32.totalorder %s17, 0
      %p133 = por %p131, %p132
      %p134 = scmp.ne.s32.totalorder %s123, %s126
      %p135 = scmp.eq.s32.totalorder %s22, 2
      %p136 = por %p134, %p135
      %p137 = scmp.ne.s32.totalorder %s126, %s127
      %p138 = scmp.eq.s32.totalorder %s22, 0
      %p139 = por %p137, %p138
      %p140 = scmp.ne.s32.totalorder %s126, %s127
      %p141 = scmp.eq.s32.totalorder %s23, 2
      %p142 = por %p140, %p141
      %p144 = scmp.ne.s32.totalorder %s127, %s143
      %p145 = scmp.eq.s32.totalorder %s23, 0
      %p146 = por %p144, %p145
      %p147 = scmp.le.s32.totalorder 1, %s17
      %p148 = scmp.lt.s32.totalorder %s17, 4
      %p149 = pnand %p147, %p148
      %p150 = pneg %p149
      // Predicated region
      $region9: #{tpu_custom_call.1} parent=5 // pred_check
        _
      $region10: #{tpu_custom_call.1} parent=5 // pred_check_branch
        %152 = sbr.rel (%p149) target = $region12
      $region11: #{tpu_custom_call.1} parent=5 // pred_region
        %s153 = ssub.s32 %s17, 1
        // Predicated region
        $region13: #{tpu_custom_call.1} parent=11 // pred_check
          %p154 = pneg %p109
        $region14: #{tpu_custom_call.1} parent=11 // pred_check_branch
          %156 = sbr.rel (%p154) target = $region16
        $region15: #{tpu_custom_call.1} parent=11 // pred_region
          %s157 = sld [smem:[#allocation4 + %s30]]
          %s158 = sadd.s32 %s157, %s31
          %s159 = smul.u32 16, %s158
          %s161 = ssub.s32 2048, 2048
          %162 = vsyncadd [#allocation9], %s161
          %s163 = sadd.s32 %s30, %s159
          %s164 = smul.addr %s163, 128
          %s165 = scalar_lea.hbm %s2, %s164
          %s166 = sshll.u32 [#allocation8], 4
          %s167 = int_to_ptr.vmem [resolvable:$true] %s166
          %172 = dma.hbm_to_vmem [thread:$0]  %s165, 2048, %s167, [#allocation9], 128, 128, 8
        $region16: #{tpu_custom_call.1} parent=11 // pred_fallthru
          _
      $region12: #{tpu_custom_call.1} parent=5 // pred_fallthru
        _
      %p173 = scmp.lt.s32.totalorder %s17, 3
      // Predicated region
      $region17: #{tpu_custom_call.1} parent=5 // pred_check
        %p174 = pneg %p173
      $region18: #{tpu_custom_call.1} parent=5 // pred_check_branch
        %176 = sbr.rel (%p174) target = $region20
      $region19: #{tpu_custom_call.1} parent=5 // pred_region
        // Predicated region
        $region21: #{tpu_custom_call.1} parent=19 // pred_check
          %p177 = pneg %p71
        $region22: #{tpu_custom_call.1} parent=19 // pred_check_branch
          %179 = sbr.rel (%p177) target = $region24
        $region23: #{tpu_custom_call.1} parent=19 // pred_region
          %s180 = sand.u32 %s61, 1
          %s181 = scalar_lea.sflag [#allocation6], %s180
          %s182 = sand.u32 %s61, 1
          %s183 = smul.addr %s182, 128
          %s184 = scalar_lea.vmem [#allocation5], %s183
          %s185 = sld [smem:[#allocation4 + %s26]]
          %s186 = sadd.s32 %s185, %s27
          %s187 = smul.u32 16, %s25
          %s189 = ssub.s32 2048, 2048
          %190 = vsyncadd %s181, %s189
          %s191 = sadd.s32 %s186, %s187
          %s192 = smul.addr %s24, 16
          %s193 = sadd.s32 %s191, %s192
          %s194 = smul.addr %s193, 128
          %s195 = scalar_lea.hbm %s1, %s194
          %s196 = sshll.u32 %s184, 4
          %s197 = int_to_ptr.vmem [resolvable:$true] %s196
          %202 = dma.hbm_to_vmem [thread:$0]  %s195, 2048, %s197, %s181, 128, 128, 8
        $region24: #{tpu_custom_call.1} parent=19 // pred_fallthru
          _
      $region20: #{tpu_custom_call.1} parent=5 // pred_fallthru
        _
      %p203 = scmp.le.s32.totalorder 1, %s17
      %p204 = scmp.lt.s32.totalorder %s17, 4
      %p205 = pnand %p203, %p204
      %p206 = pneg %p205
      // Predicated region
      $region25: #{tpu_custom_call.1} parent=5 // pred_check
        _
      $region26: #{tpu_custom_call.1} parent=5 // pred_check_branch
        %208 = sbr.rel (%p205) target = $region28
      $region27: #{tpu_custom_call.1} parent=5 // pred_region
        %s209 = ssub.s32 %s17, 1
        %s210 = sand.u32 %s64, 1
        %s211 = scalar_lea.sflag [#allocation6], %s210
        %s212 = sand.u32 %s64, 1
        %s213 = smul.addr %s212, 128
        %s214 = scalar_lea.vmem [#allocation5], %s213
        // Predicated region
        $region29: #{tpu_custom_call.1} parent=27 // pred_check
          %p215 = pneg %p77
        $region30: #{tpu_custom_call.1} parent=27 // pred_check_branch
          %217 = sbr.rel (%p215) target = $region32
        $region31: #{tpu_custom_call.1} parent=27 // pred_region
          %218 = dma.done %s211, 2048
        $region32: #{tpu_custom_call.1} parent=27 // pred_fallthru
          _
        // Predicated region
        $region33: #{tpu_custom_call.1} parent=27 // pred_check
          %p219 = pneg %p109
        $region34: #{tpu_custom_call.1} parent=27 // pred_check_branch
          %221 = sbr.rel (%p219) target = $region36
        $region35: #{tpu_custom_call.1} parent=27 // pred_region
          %222 = dma.done [#allocation9], 2048
        $region36: #{tpu_custom_call.1} parent=27 // pred_fallthru
          _
        %s223 = sand.u32 %s64, 1
        %s224 = scalar_lea.sflag [#allocation6], %s223
        %s225 = sand.u32 %s64, 1
        %s226 = smul.addr %s225, 128
        %s227 = scalar_lea.vmem [#allocation5], %s226
        %p228 = pneg %p77
        %p229 = pneg %p74
        %p230 = pneg %p109
        %p231 = pneg %p106
        %p232 = pneg %p139
        %p233 = pneg %p136
        %s234 = sand.u32 %s126, 1
        %s235 = scalar_lea.sflag [#allocation7], %s234
        %s236 = sand.u32 %s126, 1
        %s237 = smul.addr %s236, 128
        %s238 = scalar_lea.vmem [#allocation10], %s237
        %s239 = sld [smem:[#allocation4 + %s30]]
        %s240 = sadd.s32 %s239, %s31
        %s241 = smul.u32 16, %s29
        %s242 = sld [smem:[#allocation4 + %s30]]
        %s243 = sadd.s32 %s242, %s31
        %s244 = smul.u32 16, %s243
        %s245 = smul.u32 16, %s29
        %p246 = scmp.eq.s32.totalorder %s31, 0
        // Predicated region
        $region37: #{tpu_custom_call.1} parent=27 // pred_check
          %p247 = pneg %p246
        $region38: #{tpu_custom_call.1} parent=27 // pred_check_branch
          %249 = sbr.rel (%p247) target = $region40
        $region39: #{tpu_custom_call.1} parent=27 // pred_region
          %250 = vst [vmem:[#allocation2] sm:$0xff] 0.0
          %251 = vst [vmem:[#allocation2 + $0x8] sm:$0xff] 0.0
          %252 = vst [vmem:[#allocation2 + $0x10] sm:$0xff] 0.0
          %253 = vst [vmem:[#allocation2 + $0x18] sm:$0xff] 0.0
          %254 = vst [vmem:[#allocation2 + $0x20] sm:$0xff] 0.0
          %255 = vst [vmem:[#allocation2 + $0x28] sm:$0xff] 0.0
          %256 = vst [vmem:[#allocation2 + $0x30] sm:$0xff] 0.0
          %257 = vst [vmem:[#allocation2 + $0x38] sm:$0xff] 0.0
          %258 = vst [vmem:[#allocation2 + $0x40] sm:$0xff] 0.0
          %259 = vst [vmem:[#allocation2 + $0x48] sm:$0xff] 0.0
          %260 = vst [vmem:[#allocation2 + $0x50] sm:$0xff] 0.0
          %261 = vst [vmem:[#allocation2 + $0x58] sm:$0xff] 0.0
          %262 = vst [vmem:[#allocation2 + $0x60] sm:$0xff] 0.0
          %263 = vst [vmem:[#allocation2 + $0x68] sm:$0xff] 0.0
          %264 = vst [vmem:[#allocation2 + $0x70] sm:$0xff] 0.0
          %265 = vst [vmem:[#allocation2 + $0x78] sm:$0xff] 0.0
        $region40: #{tpu_custom_call.1} parent=27 // pred_fallthru
          _
        %v266 = vld [vmem:[#allocation2] sm:$0xff]
        %v267 = vld [vmem:[#allocation2 + $0x8] sm:$0xff]
        %v268 = vld [vmem:[#allocation2 + $0x10] sm:$0xff]
        %v269 = vld [vmem:[#allocation2 + $0x18] sm:$0xff]
        %v270 = vld [vmem:[#allocation2 + $0x20] sm:$0xff]
        %v271 = vld [vmem:[#allocation2 + $0x28] sm:$0xff]
        %v272 = vld [vmem:[#allocation2 + $0x30] sm:$0xff]
        %v273 = vld [vmem:[#allocation2 + $0x38] sm:$0xff]
        %v274 = vld [vmem:[#allocation2 + $0x40] sm:$0xff]
        %v275 = vld [vmem:[#allocation2 + $0x48] sm:$0xff]
        %v276 = vld [vmem:[#allocation2 + $0x50] sm:$0xff]
        %v277 = vld [vmem:[#allocation2 + $0x58] sm:$0xff]
        %v278 = vld [vmem:[#allocation2 + $0x60] sm:$0xff]
        %v279 = vld [vmem:[#allocation2 + $0x68] sm:$0xff]
        %v280 = vld [vmem:[#allocation2 + $0x70] sm:$0xff]
        %v281 = vld [vmem:[#allocation2 + $0x78] sm:$0xff]
        %v282 = vld [vmem:[%s214] sm:$0xff]
        %v283 = vld [vmem:[%s214 + $0x8] sm:$0xff]
        %v284 = vld [vmem:[%s214 + $0x10] sm:$0xff]
        %v285 = vld [vmem:[%s214 + $0x18] sm:$0xff]
        %v286 = vld [vmem:[%s214 + $0x20] sm:$0xff]
        %v287 = vld [vmem:[%s214 + $0x28] sm:$0xff]
        %v288 = vld [vmem:[%s214 + $0x30] sm:$0xff]
        %v289 = vld [vmem:[%s214 + $0x38] sm:$0xff]
        %v290 = vld [vmem:[%s214 + $0x40] sm:$0xff]
        %v291 = vld [vmem:[%s214 + $0x48] sm:$0xff]
        %v292 = vld [vmem:[%s214 + $0x50] sm:$0xff]
        %v293 = vld [vmem:[%s214 + $0x58] sm:$0xff]
        %v294 = vld [vmem:[%s214 + $0x60] sm:$0xff]
        %v295 = vld [vmem:[%s214 + $0x68] sm:$0xff]
        %v296 = vld [vmem:[%s214 + $0x70] sm:$0xff]
        %v297 = vld [vmem:[%s214 + $0x78] sm:$0xff]
        %v298 = vld [vmem:[#allocation8] sm:$0xff]
        %v299 = vld [vmem:[#allocation8 + $0x8] sm:$0xff]
        %v300 = vld [vmem:[#allocation8 + $0x10] sm:$0xff]
        %v301 = vld [vmem:[#allocation8 + $0x18] sm:$0xff]
        %v302 = vld [vmem:[#allocation8 + $0x20] sm:$0xff]
        %v303 = vld [vmem:[#allocation8 + $0x28] sm:$0xff]
        %v304 = vld [vmem:[#allocation8 + $0x30] sm:$0xff]
        %v305 = vld [vmem:[#allocation8 + $0x38] sm:$0xff]
        %v306 = vld [vmem:[#allocation8 + $0x40] sm:$0xff]
        %v307 = vld [vmem:[#allocation8 + $0x48] sm:$0xff]
        %v308 = vld [vmem:[#allocation8 + $0x50] sm:$0xff]
        %v309 = vld [vmem:[#allocation8 + $0x58] sm:$0xff]
        %v310 = vld [vmem:[#allocation8 + $0x60] sm:$0xff]
        %v311 = vld [vmem:[#allocation8 + $0x68] sm:$0xff]
        %v312 = vld [vmem:[#allocation8 + $0x70] sm:$0xff]
        %v313 = vld [vmem:[#allocation8 + $0x78] sm:$0xff]
        %314 = vmatprep.subr.mxu0 0.0
        %315 = vmatpush1.msra.mxu0 %v313
        %316 = vmatprep.subr.mxu0 0.0
        %317 = vmatpush1.msra.mxu0 %v312
        %318 = vmatprep.subr.mxu0 0.0
        %319 = vmatpush1.msra.mxu0 %v311
        %320 = vmatprep.subr.mxu0 0.0
        %321 = vmatpush1.msra.mxu0 %v310
        %322 = vmatprep.subr.mxu0 0.0
        %323 = vmatpush1.msra.mxu0 %v309
        %324 = vmatprep.subr.mxu0 0.0
        %325 = vmatpush1.msra.mxu0 %v308
        %326 = vmatprep.subr.mxu0 0.0
        %327 = vmatpush1.msra.mxu0 %v307
        %328 = vmatprep.subr.mxu0 0.0
        %329 = vmatpush1.msra.mxu0 %v306
        %330 = vmatprep.subr.mxu0 0.0
        %331 = vmatpush1.msra.mxu0 %v305
        %332 = vmatprep.subr.mxu0 0.0
        %333 = vmatpush1.msra.mxu0 %v304
        %334 = vmatprep.subr.mxu0 0.0
        %335 = vmatpush1.msra.mxu0 %v303
        %336 = vmatprep.subr.mxu0 0.0
        %337 = vmatpush1.msra.mxu0 %v302
        %338 = vmatprep.subr.mxu0 0.0
        %339 = vmatpush1.msra.mxu0 %v301
        %340 = vmatprep.subr.mxu0 0.0
        %341 = vmatpush1.msra.mxu0 %v300
        %342 = vmatprep.subr.mxu0 0.0
        %343 = vmatpush1.msra.mxu0 %v299
        %344 = vmatprep.subr.mxu0 0.0
        %345 = vmatpush1.msra.mxu0 %v298
        %346 = vmatprep.subr.mxu0 0.0
        %347 = vmatpush2.msra.mxu0 0.0
        %348 = vmatprep.subr.mxu0 0.0
        %349 = vmatpush2.msra.mxu0 0.0
        %350 = vmatprep.subr.mxu0 0.0
        %351 = vmatpush2.msra.mxu0 0.0
        %352 = vmatprep.subr.mxu0 0.0
        %353 = vmatpush2.msra.mxu0 0.0
        %354 = vmatprep.subr.mxu0 0.0
        %355 = vmatpush2.msra.mxu0 0.0
        %356 = vmatprep.subr.mxu0 0.0
        %357 = vmatpush2.msra.mxu0 0.0
        %358 = vmatprep.subr.mxu0 0.0
        %359 = vmatpush2.msra.mxu0 0.0
        %360 = vmatprep.subr.mxu0 0.0
        %361 = vmatpush2.msra.mxu0 0.0
        %362 = vmatprep.subr.mxu0 0.0
        %363 = vmatpush2.msra.mxu0 0.0
        %364 = vmatprep.subr.mxu0 0.0
        %365 = vmatpush2.msra.mxu0 0.0
        %366 = vmatprep.subr.mxu0 0.0
        %367 = vmatpush2.msra.mxu0 0.0
        %368 = vmatprep.subr.mxu0 0.0
        %369 = vmatpush2.msra.mxu0 0.0
        %370 = vmatprep.subr.mxu0 0.0
        %371 = vmatpush2.msra.mxu0 0.0
        %372 = vmatprep.subr.mxu0 0.0
        %373 = vmatpush2.msra.mxu0 0.0
        %374 = vmatprep.subr.mxu0 0.0
        %375 = vmatpush2.msra.mxu0 0.0
        %376 = vmatprep.subr.mxu0 0.0
        %377 = vmatpush2.msra.mxu0 0.0
        %378 = vmatprep.mubr.f32.mxu0 0.0
        %379 = vmatmul.mubr.f32.gmra.mxu0 %v282
        %v380 = vpop.f32.mrf.mxu0
        %v381 = vadd.f32 0.0, %v380
        %v382 = vpop.f32.mrf.mxu0
        %383 = vmatprep.mubr.f32.mxu0 0.0
        %384 = vmatmul.mubr.f32.gmra.mxu0 %v283
        %v385 = vpop.f32.mrf.mxu0
        %v386 = vadd.f32 0.0, %v385
        %v387 = vpop.f32.mrf.mxu0
        %388 = vmatprep.mubr.f32.mxu0 0.0
        %389 = vmatmul.mubr.f32.gmra.mxu0 %v284
        %v390 = vpop.f32.mrf.mxu0
        %v391 = vadd.f32 0.0, %v390
        %v392 = vpop.f32.mrf.mxu0
        %393 = vmatprep.mubr.f32.mxu0 0.0
        %394 = vmatmul.mubr.f32.gmra.mxu0 %v285
        %v395 = vpop.f32.mrf.mxu0
        %v396 = vadd.f32 0.0, %v395
        %v397 = vpop.f32.mrf.mxu0
        %398 = vmatprep.mubr.f32.mxu0 0.0
        %399 = vmatmul.mubr.f32.gmra.mxu0 %v286
        %v400 = vpop.f32.mrf.mxu0
        %v401 = vadd.f32 0.0, %v400
        %v402 = vpop.f32.mrf.mxu0
        %403 = vmatprep.mubr.f32.mxu0 0.0
        %404 = vmatmul.mubr.f32.gmra.mxu0 %v287
        %v405 = vpop.f32.mrf.mxu0
        %v406 = vadd.f32 0.0, %v405
        %v407 = vpop.f32.mrf.mxu0
        %408 = vmatprep.mubr.f32.mxu0 0.0
        %409 = vmatmul.mubr.f32.gmra.mxu0 %v288
        %v410 = vpop.f32.mrf.mxu0
        %v411 = vadd.f32 0.0, %v410
        %v412 = vpop.f32.mrf.mxu0
        %413 = vmatprep.mubr.f32.mxu0 0.0
        %414 = vmatmul.mubr.f32.gmra.mxu0 %v289
        %v415 = vpop.f32.mrf.mxu0
        %v416 = vadd.f32 0.0, %v415
        %v417 = vpop.f32.mrf.mxu0
        %418 = vmatprep.mubr.f32.mxu0 0.0
        %419 = vmatmul.mubr.f32.gmra.mxu0 %v290
        %v420 = vpop.f32.mrf.mxu0
        %v421 = vadd.f32 0.0, %v420
        %v422 = vpop.f32.mrf.mxu0
        %423 = vmatprep.mubr.f32.mxu0 0.0
        %424 = vmatmul.mubr.f32.gmra.mxu0 %v291
        %v425 = vpop.f32.mrf.mxu0
        %v426 = vadd.f32 0.0, %v425
        %v427 = vpop.f32.mrf.mxu0
        %428 = vmatprep.mubr.f32.mxu0 0.0
        %429 = vmatmul.mubr.f32.gmra.mxu0 %v292
        %v430 = vpop.f32.mrf.mxu0
        %v431 = vadd.f32 0.0, %v430
        %v432 = vpop.f32.mrf.mxu0
        %433 = vmatprep.mubr.f32.mxu0 0.0
        %434 = vmatmul.mubr.f32.gmra.mxu0 %v293
        %v435 = vpop.f32.mrf.mxu0
        %v436 = vadd.f32 0.0, %v435
        %v437 = vpop.f32.mrf.mxu0
        %438 = vmatprep.mubr.f32.mxu0 0.0
        %439 = vmatmul.mubr.f32.gmra.mxu0 %v294
        %v440 = vpop.f32.mrf.mxu0
        %v441 = vadd.f32 0.0, %v440
        %v442 = vpop.f32.mrf.mxu0
        %443 = vmatprep.mubr.f32.mxu0 0.0
        %444 = vmatmul.mubr.f32.gmra.mxu0 %v295
        %v445 = vpop.f32.mrf.mxu0
        %v446 = vadd.f32 0.0, %v445
        %v447 = vpop.f32.mrf.mxu0
        %448 = vmatprep.mubr.f32.mxu0 0.0
        %449 = vmatmul.mubr.f32.gmra.mxu0 %v296
        %v450 = vpop.f32.mrf.mxu0
        %v451 = vadd.f32 0.0, %v450
        %v452 = vpop.f32.mrf.mxu0
        %453 = vmatprep.mubr.f32.mxu0 0.0
        %454 = vmatmul.mubr.f32.gmra.mxu0 %v297
        %v455 = vpop.f32.mrf.mxu0
        %v456 = vadd.f32 0.0, %v455
        %v457 = vpop.f32.mrf.mxu0
        %458 = vdwg.mxu0
        %v459 = vadd.f32 %v266, %v381
        %v460 = vadd.f32 %v267, %v386
        %v461 = vadd.f32 %v268, %v391
        %v462 = vadd.f32 %v269, %v396
        %v463 = vadd.f32 %v270, %v401
        %v464 = vadd.f32 %v271, %v406
        %v465 = vadd.f32 %v272, %v411
        %v466 = vadd.f32 %v273, %v416
        %v467 = vadd.f32 %v274, %v421
        %v468 = vadd.f32 %v275, %v426
        %v469 = vadd.f32 %v276, %v431
        %v470 = vadd.f32 %v277, %v436
        %v471 = vadd.f32 %v278, %v441
        %v472 = vadd.f32 %v279, %v446
        %v473 = vadd.f32 %v280, %v451
        %v474 = vadd.f32 %v281, %v456
        %475 = vst [vmem:[#allocation2] sm:$0xff] %v459
        %476 = vst [vmem:[#allocation2 + $0x8] sm:$0xff] %v460
        %477 = vst [vmem:[#allocation2 + $0x10] sm:$0xff] %v461
        %478 = vst [vmem:[#allocation2 + $0x18] sm:$0xff] %v462
        %479 = vst [vmem:[#allocation2 + $0x20] sm:$0xff] %v463
        %480 = vst [vmem:[#allocation2 + $0x28] sm:$0xff] %v464
        %481 = vst [vmem:[#allocation2 + $0x30] sm:$0xff] %v465
        %482 = vst [vmem:[#allocation2 + $0x38] sm:$0xff] %v466
        %483 = vst [vmem:[#allocation2 + $0x40] sm:$0xff] %v467
        %484 = vst [vmem:[#allocation2 + $0x48] sm:$0xff] %v468
        %485 = vst [vmem:[#allocation2 + $0x50] sm:$0xff] %v469
        %486 = vst [vmem:[#allocation2 + $0x58] sm:$0xff] %v470
        %487 = vst [vmem:[#allocation2 + $0x60] sm:$0xff] %v471
        %488 = vst [vmem:[#allocation2 + $0x68] sm:$0xff] %v472
        %489 = vst [vmem:[#allocation2 + $0x70] sm:$0xff] %v473
        %490 = vst [vmem:[#allocation2 + $0x78] sm:$0xff] %v474
        // Predicated region
        $region41: #{tpu_custom_call.1} parent=27 // pred_check
          %p491 = pneg %p246
        $region42: #{tpu_custom_call.1} parent=27 // pred_check_branch
          %493 = sbr.rel (%p491) target = $region44
        $region43: #{tpu_custom_call.1} parent=27 // pred_region
          %v494 = vld [vmem:[#allocation2] sm:$0xff]
          %v495 = vld [vmem:[#allocation2 + $0x8] sm:$0xff]
          %v496 = vld [vmem:[#allocation2 + $0x10] sm:$0xff]
          %v497 = vld [vmem:[#allocation2 + $0x18] sm:$0xff]
          %v498 = vld [vmem:[#allocation2 + $0x20] sm:$0xff]
          %v499 = vld [vmem:[#allocation2 + $0x28] sm:$0xff]
          %v500 = vld [vmem:[#allocation2 + $0x30] sm:$0xff]
          %v501 = vld [vmem:[#allocation2 + $0x38] sm:$0xff]
          %v502 = vld [vmem:[#allocation2 + $0x40] sm:$0xff]
          %v503 = vld [vmem:[#allocation2 + $0x48] sm:$0xff]
          %v504 = vld [vmem:[#allocation2 + $0x50] sm:$0xff]
          %v505 = vld [vmem:[#allocation2 + $0x58] sm:$0xff]
          %v506 = vld [vmem:[#allocation2 + $0x60] sm:$0xff]
          %v507 = vld [vmem:[#allocation2 + $0x68] sm:$0xff]
          %v508 = vld [vmem:[#allocation2 + $0x70] sm:$0xff]
          %v509 = vld [vmem:[#allocation2 + $0x78] sm:$0xff]
          %510 = vst [vmem:[%s238] sm:$0xff] %v494
          %511 = vst [vmem:[%s238 + $0x8] sm:$0xff] %v495
          %512 = vst [vmem:[%s238 + $0x10] sm:$0xff] %v496
          %513 = vst [vmem:[%s238 + $0x18] sm:$0xff] %v497
          %514 = vst [vmem:[%s238 + $0x20] sm:$0xff] %v498
          %515 = vst [vmem:[%s238 + $0x28] sm:$0xff] %v499
          %516 = vst [vmem:[%s238 + $0x30] sm:$0xff] %v500
          %517 = vst [vmem:[%s238 + $0x38] sm:$0xff] %v501
          %518 = vst [vmem:[%s238 + $0x40] sm:$0xff] %v502
          %519 = vst [vmem:[%s238 + $0x48] sm:$0xff] %v503
          %520 = vst [vmem:[%s238 + $0x50] sm:$0xff] %v504
          %521 = vst [vmem:[%s238 + $0x58] sm:$0xff] %v505
          %522 = vst [vmem:[%s238 + $0x60] sm:$0xff] %v506
          %523 = vst [vmem:[%s238 + $0x68] sm:$0xff] %v507
          %524 = vst [vmem:[%s238 + $0x70] sm:$0xff] %v508
          %525 = vst [vmem:[%s238 + $0x78] sm:$0xff] %v509
        $region44: #{tpu_custom_call.1} parent=27 // pred_fallthru
          _
        %s526 = sand.u32 %s126, 1
        %s527 = scalar_lea.sflag [#allocation7], %s526
        %s528 = sand.u32 %s126, 1
        %s529 = smul.addr %s528, 128
        %s530 = scalar_lea.vmem [#allocation10], %s529
        // Predicated region
        $region45: #{tpu_custom_call.1} parent=27 // pred_check
          %p531 = pneg %p136
        $region46: #{tpu_custom_call.1} parent=27 // pred_check_branch
          %533 = sbr.rel (%p531) target = $region48
        $region47: #{tpu_custom_call.1} parent=27 // pred_region
          %s534 = smul.u32 16, %s29
          %s536 = ssub.s32 2048, 2048
          %537 = vsyncadd %s527, %s536
          %s538 = sadd.s32 %s30, %s534
          %s539 = smul.addr %s28, 16
          %s540 = sadd.s32 %s538, %s539
          %s541 = smul.addr %s540, 128
          %s542 = scalar_lea.hbm %s3, %s541
          %s543 = sshll.u32 %s530, 4
          %s544 = int_to_ptr.vmem [resolvable:$true] %s543
          %549 = dma.vmem_to_hbm [thread:$0]  %s544, 2048, %s542, %s527, 128, 128, 8
        $region48: #{tpu_custom_call.1} parent=27 // pred_fallthru
          _
      $region28: #{tpu_custom_call.1} parent=5 // pred_fallthru
        _
      %p550 = scmp.le.s32.totalorder 2, %s17
      // Predicated region
      $region49: #{tpu_custom_call.1} parent=5 // pred_check
        %p551 = pneg %p550
      $region50: #{tpu_custom_call.1} parent=5 // pred_check_branch
        %553 = sbr.rel (%p551) target = $region52
      $region51: #{tpu_custom_call.1} parent=5 // pred_region
        %s554 = ssub.s32 %s17, 2
        // Predicated region
        $region53: #{tpu_custom_call.1} parent=51 // pred_check
          %p555 = pneg %p142
        $region54: #{tpu_custom_call.1} parent=51 // pred_check_branch
          %557 = sbr.rel (%p555) target = $region56
        $region55: #{tpu_custom_call.1} parent=51 // pred_region
          %s558 = sand.u32 %s127, 1
          %s559 = scalar_lea.sflag [#allocation7], %s558
          %s560 = sand.u32 %s127, 1
          %s561 = smul.addr %s560, 128
          %s562 = scalar_lea.vmem [#allocation10], %s561
          %563 = dma.done %s559, 2048
        $region56: #{tpu_custom_call.1} parent=51 // pred_fallthru
          _
      $region52: #{tpu_custom_call.1} parent=5 // pred_fallthru
        _
    $region6: #{tpu_custom_call.1} parent=1 // loop_footer
      %s21 = sadd.s32 1, %s17
    $region7: #{tpu_custom_call.1} parent=1 // loop_footer_branch
      %16 = sbr.rel target = $region3
    $region8: #{tpu_custom_call.1} parent=1 // loop_exit
      _
    %564 = vsyncpa [#allocation6], 1
    %s565 = scalar_lea.sflag [#allocation6], 1
    %566 = vsyncpa %s565, 1
    %567 = vsyncpa [#allocation9], 1
    %568 = vsyncpa [#allocation7], 1
    %s569 = scalar_lea.sflag [#allocation7], 1
    %570 = vsyncpa %s569, 1

</llo_original>
